<compile_context>
chip_gen: v7x
topology: tpu7x:2x2x1
jax: 0.10.0
libtpu: 0.0.40
codegen_flags: <defaults>
</compile_context>

<pallas_src>
import jax
import jax.numpy as jnp
from jax import lax
from jax.experimental import pallas as pl
from jax.experimental.pallas import tpu as pltpu

BN_EPS = 1e-5
MAX_TILE_N = 8192          # batch-tile cap (lanes of the output / sublanes of x)
TILE_ALIGN = 512           # keep tiles a multiple of 512 (lane-dense, aligned DMA)

# flash-attention style "contract both operands on their last axis" (A @ B^T)
_TRANS_B_DIMS = (((1,), (1,)), ((), ()))


def _mlp_kernel(x_ref, w1_ref, b1_ref, w2_ref, b2_ref, w3_ref, b3_ref, out_ref):
    # Shapes per grid step (T = tile_n):
    #   x_ref : (T, 12)  f32   -- native input layout, no host transpose
    #   w1    : (64, 12) cd    b1: (64, 1) f32
    #   w2    : (64, 64) cd    b2: (64, 1) f32   (BN1 folded)
    #   w3    : (64, 1)  f32   b3: (1, 1)  f32   (BN2 folded, VPU final layer)
    #   out   : (1, T)   f32   -- lane-dense output row
    cd = w1_ref.dtype                                  # compute dtype (bf16 or f32)
    xb = x_ref[...].astype(cd)                         # cast in-kernel: no extra HBM pass

    # Layer 1:  (64,12) @ (T,12)^T -> (64, T)   (MXU, transposed-RHS contraction)
    h = lax.dot_general(w1_ref[...], xb, _TRANS_B_DIMS,
                        preferred_element_type=jnp.float32)
    h = jnp.maximum(h + b1_ref[...], 0.0)

    # Layer 2 (BN1 folded in):  (64,64) @ (64,T) -> (64, T)
    h = jnp.dot(w2_ref[...], h.astype(cd), preferred_element_type=jnp.float32)
    h = jnp.maximum(h + b2_ref[...], 0.0)

    # Dropout(p=0.1) is identity in eval mode.
    # Output layer (BN2 folded in) on VPU+XLU: broadcast-mul + sublane reduction,
    # instead of an M=1 MXU matmul.
    out_ref[...] = jnp.sum(h * w3_ref[...], axis=0, keepdims=True) + b3_ref[...]


def _fold_bn_into_next_linear(w_next, b_next, gamma, beta, mean, var, eps=BN_EPS):
    """Fold eval-mode BN (applied *before* w_next) into w_next/b_next (torch (out,in))."""
    scale = gamma / jnp.sqrt(var + eps)              # (in,)
    shift = beta - mean * scale                      # (in,)
    return w_next * scale[None, :], b_next + w_next @ shift


def prepare_params(params, compute_dtype=jnp.bfloat16):
    """One-time prep, hoisted off the per-call path (review item):
    fold both eval-mode BatchNorms into the following Linears, reshape the biases,
    and cast the MXU operands to the compute dtype."""
    w2f, b2f = _fold_bn_into_next_linear(params["w2"], params["b2"],
                                         params["g1"], params["be1"],
                                         params["m1"], params["v1"])
    w3f, b3f = _fold_bn_into_next_linear(params["w3"], params["b3"],
                                         params["g2"], params["be2"],
                                         params["m2"], params["v2"])
    return (
        params["w1"].astype(compute_dtype),                 # (64, 12)
        params["b1"].reshape(64, 1).astype(jnp.float32),    # (64, 1)
        w2f.astype(compute_dtype),                          # (64, 64)
        b2f.reshape(64, 1).astype(jnp.float32),             # (64, 1)
        w3f.reshape(64, 1).astype(jnp.float32),             # (64, 1) column for VPU
        b3f.reshape(1, 1).astype(jnp.float32),              # (1, 1)
    )


def _pick_tile(n, max_tile=MAX_TILE_N, align=TILE_ALIGN):
    # >=2 grid steps whenever possible (v7x megacore sharding of the "parallel"
    # batch axis), bounded last-tile padding, tile a multiple of 512.
    t = pl.cdiv(pl.cdiv(n, 2), align) * align
    return int(max(align, min(max_tile, t)))


def binary_classification_forward(x, folded_params, *, max_tile=MAX_TILE_N):
    """x: (N, 12) float32 (native layout).  folded_params: output of prepare_params."""
    n, f = x.shape
    w1, b1, w2, b2, w3c, b3 = folded_params

    tile_n = _pick_tile(n, max_tile)
    num_tiles = pl.cdiv(n, tile_n)
    n_pad = num_tiles * tile_n
    if n_pad != n:
        # Plain row pad (no transpose); disappears entirely when N is tile-aligned.
        x = jnp.pad(x, ((0, n_pad - n), (0, 0)))

    const = lambda i: (0, 0)  # weights/biases: VMEM-resident across grid steps
    in_specs = [
        pl.BlockSpec((tile_n, f), lambda i: (i, 0)),   # batch-tiled native x
        pl.BlockSpec((64, f), const),
        pl.BlockSpec((64, 1), const),
        pl.BlockSpec((64, 64), const),
        pl.BlockSpec((64, 1), const),
        pl.BlockSpec((64, 1), const),
        pl.BlockSpec((1, 1), const),
    ]
    out_spec = pl.BlockSpec((1, tile_n), lambda i: (0, i))  # lane-dense output row

    flops = 2 * n_pad * (12 * 64 + 64 * 64 + 64 * 1)
    bytes_accessed = (x.dtype.itemsize * 12 * n_pad            # x tiles (f32 in HBM)
                      + 4 * n_pad                              # output row
                      + w1.dtype.itemsize * (64 * 12 + 64 * 64)
                      + 4 * (64 + 64 + 64 + 1))

    out_row = pl.pallas_call(
        _mlp_kernel,
        out_shape=jax.ShapeDtypeStruct((1, n_pad), jnp.float32),
        grid=(num_tiles,),
        in_specs=in_specs,
        out_specs=out_spec,
        compiler_params=pltpu.CompilerParams(
            dimension_semantics=("parallel",),      # v7x: shard batch over 2 TCs
            vmem_limit_bytes=48 * 1024 * 1024,      # ~18 MiB used at tile=8192
        ),
        cost_estimate=pl.CostEstimate(
            flops=flops, transcendentals=0, bytes_accessed=bytes_accessed),
    )(x, w1, b1, w2, b2, w3c, b3)

    return out_row[:, :n].T                          # (N, 1)


def init_params(key):
    """Deterministic torch-style parameters (weights stored as (out, in))."""
    ks = jax.random.split(key, 8)

    def linear(kw, kb, fan_in, fan_out):
        bound = 1.0 / jnp.sqrt(fan_in)
        w = jax.random.uniform(kw, (fan_out, fan_in), jnp.float32, -bound, bound)
        b = jax.random.uniform(kb, (fan_out,), jnp.float32, -bound, bound)
        return w, b

    w1, b1 = linear(ks[0], ks[1], 12, 64)
    w2, b2 = linear(ks[2], ks[3], 64, 64)
    w3, b3 = linear(ks[4], ks[5], 64, 1)

    # BN params perturbed away from defaults so the BN path is exercised.
    g1 = 1.0 + 0.1 * jax.random.normal(ks[6], (64,), jnp.float32)
    be1 = 0.1 * jax.random.normal(ks[7], (64,), jnp.float32)
    g2 = jnp.flip(g1)
    be2 = -be1
    m1 = 0.05 * jnp.arange(64, dtype=jnp.float32) / 64.0
    v1 = 1.0 + 0.01 * jnp.arange(64, dtype=jnp.float32)
    m2 = -m1
    v2 = jnp.flip(v1)

    return dict(w1=w1, b1=b1, g1=g1, be1=be1, m1=m1, v1=v1,
                w2=w2, b2=b2, g2=g2, be2=be2, m2=m2, v2=v2,
                w3=w3, b3=b3)


def reference_forward(x, p):
    """Pure-JAX eval-mode reference (un-folded BN), torch-style weights."""
    h = jnp.maximum(x @ p["w1"].T + p["b1"], 0.0)
    h = (h - p["m1"]) / jnp.sqrt(p["v1"] + BN_EPS) * p["g1"] + p["be1"]
    h = jnp.maximum(h @ p["w2"].T + p["b2"], 0.0)
    h = (h - p["m2"]) / jnp.sqrt(p["v2"] + BN_EPS) * p["g2"] + p["be2"]
    return h @ p["w3"].T + p["b3"]


if __name__ == "__main__":
    key = jax.random.PRNGKey(0)
    k_x, k_p = jax.random.split(key)

    batch = 777  # not tile-aligned: exercises adaptive tiling (2 steps) + row padding
    x = jax.random.normal(k_x, (batch, 12), dtype=jnp.float32)
    params = init_params(k_p)
    ref = reference_forward(x, params)

    fwd = jax.jit(binary_classification_forward)

    # f32 compute path: matches the PyTorch module's numerics tightly.
    folded_f32 = prepare_params(params, jnp.float32)
    out_f32 = jax.block_until_ready(fwd(x, folded_f32))
    assert out_f32.shape == (batch, 1), out_f32.shape
    assert jnp.allclose(out_f32, ref, atol=1e-4, rtol=1e-4), "f32 path mismatch"

    # bf16 matmul path (performance default on TPU MXU, f32 accumulation):
    # loose tolerance per review guidance.
    folded_bf16 = prepare_params(params, jnp.bfloat16)
    out_bf16 = jax.block_until_ready(fwd(x, folded_bf16))
    assert out_bf16.shape == (batch, 1), out_bf16.shape
    assert jnp.allclose(out_bf16, ref, atol=1e-1, rtol=1e-1), "bf16 path mismatch"

    print("KERNEL_OK")
</pallas_src>

<mosaic_0001>
module attributes {stable_mosaic.version = 11 : i64} {
  func.func @_mlp_kernel(%arg0: i32, %arg1: memref<512x12xf32, #tpu.memory_space<vmem>>, %arg2: memref<64x12xf32, #tpu.memory_space<vmem>>, %arg3: memref<64x1xf32, #tpu.memory_space<vmem>>, %arg4: memref<64x64xf32, #tpu.memory_space<vmem>>, %arg5: memref<64x1xf32, #tpu.memory_space<vmem>>, %arg6: memref<64x1xf32, #tpu.memory_space<vmem>>, %arg7: memref<1x1xf32, #tpu.memory_space<vmem>>, %arg8: memref<1x512xf32, #tpu.memory_space<vmem>>) attributes {dimension_semantics = [#tpu.dimension_semantics<parallel>], iteration_bounds = array<i64: 2>, scalar_prefetch = 0 : i64, scratch_operands = 0 : i64, tpu.core_type = #tpu.core_type<tc>, window_params = [{transform_indices = @transform_0, window_bounds = array<i64: 512, 12>}, {pipeline_mode = #tpu.pipeline_mode<synchronous>, transform_indices = @transform_1, window_bounds = array<i64: 64, 12>}, {pipeline_mode = #tpu.pipeline_mode<synchronous>, transform_indices = @transform_2, window_bounds = array<i64: 64, 1>}, {pipeline_mode = #tpu.pipeline_mode<synchronous>, transform_indices = @transform_3, window_bounds = array<i64: 64, 64>}, {pipeline_mode = #tpu.pipeline_mode<synchronous>, transform_indices = @transform_4, window_bounds = array<i64: 64, 1>}, {pipeline_mode = #tpu.pipeline_mode<synchronous>, transform_indices = @transform_5, window_bounds = array<i64: 64, 1>}, {pipeline_mode = #tpu.pipeline_mode<synchronous>, transform_indices = @transform_6, window_bounds = array<i64: 1, 1>}, {transform_indices = @transform_7, window_bounds = array<i64: 1, 512>}]} {
    %c0 = arith.constant 0 : index
    %c0_0 = arith.constant 0 : index
    %0 = vector.load %arg1[%c0, %c0_0] : memref<512x12xf32, #tpu.memory_space<vmem>>, vector<512x12xf32>
    %c0_1 = arith.constant 0 : index
    %c0_2 = arith.constant 0 : index
    %1 = vector.load %arg2[%c0_1, %c0_2] : memref<64x12xf32, #tpu.memory_space<vmem>>, vector<64x12xf32>
    %cst = arith.constant dense<0.000000e+00> : vector<64x512xf32>
    %2 = tpu.matmul %1, %0, %cst {dimension_numbers = #tpu.dot_dimension_numbers<[1], [1], [0], [0], [0, 0, 1, 0], [], []>} : vector<64x12xf32>, vector<512x12xf32>, vector<64x512xf32> -> vector<64x512xf32>
    %c0_3 = arith.constant 0 : index
    %c0_4 = arith.constant 0 : index
    %3 = vector.load %arg3[%c0_3, %c0_4] : memref<64x1xf32, #tpu.memory_space<vmem>>, vector<64x1xf32>
    %4 = vector.broadcast %3 : vector<64x1xf32> to vector<64x512xf32>
    %5 = arith.addf %2, %4 : vector<64x512xf32>
    %cst_5 = arith.constant 0.000000e+00 : f32
    %6 = vector.broadcast %cst_5 : f32 to vector<64x512xf32>
    %7 = arith.maximumf %5, %6 : vector<64x512xf32>
    %c0_6 = arith.constant 0 : index
    %c0_7 = arith.constant 0 : index
    %8 = vector.load %arg4[%c0_6, %c0_7] : memref<64x64xf32, #tpu.memory_space<vmem>>, vector<64x64xf32>
    %cst_8 = arith.constant dense<0.000000e+00> : vector<64x512xf32>
    %9 = tpu.matmul %8, %7, %cst_8 {dimension_numbers = #tpu.dot_dimension_numbers<[1], [0], [0], [1], [0, 0, 1, 1], [], []>} : vector<64x64xf32>, vector<64x512xf32>, vector<64x512xf32> -> vector<64x512xf32>
    %c0_9 = arith.constant 0 : index
    %c0_10 = arith.constant 0 : index
    %10 = vector.load %arg5[%c0_9, %c0_10] : memref<64x1xf32, #tpu.memory_space<vmem>>, vector<64x1xf32>
    %11 = vector.broadcast %10 : vector<64x1xf32> to vector<64x512xf32>
    %12 = arith.addf %9, %11 : vector<64x512xf32>
    %cst_11 = arith.constant 0.000000e+00 : f32
    %13 = vector.broadcast %cst_11 : f32 to vector<64x512xf32>
    %14 = arith.maximumf %12, %13 : vector<64x512xf32>
    %c0_12 = arith.constant 0 : index
    %c0_13 = arith.constant 0 : index
    %15 = vector.load %arg6[%c0_12, %c0_13] : memref<64x1xf32, #tpu.memory_space<vmem>>, vector<64x1xf32>
    %16 = vector.broadcast %15 : vector<64x1xf32> to vector<64x512xf32>
    %17 = arith.mulf %14, %16 : vector<64x512xf32>
    %cst_14 = arith.constant dense<0.000000e+00> : vector<512xf32>
    %18 = vector.multi_reduction <add>, %17, %cst_14 [0] : vector<64x512xf32> to vector<512xf32>
    %19 = vector.shape_cast %18 : vector<512xf32> to vector<1x512xf32>
    %c0_15 = arith.constant 0 : index
    %c0_16 = arith.constant 0 : index
    %20 = vector.load %arg7[%c0_15, %c0_16] : memref<1x1xf32, #tpu.memory_space<vmem>>, vector<1x1xf32>
    %21 = vector.broadcast %20 : vector<1x1xf32> to vector<1x512xf32>
    %22 = arith.addf %19, %21 : vector<1x512xf32>
    %c0_17 = arith.constant 0 : index
    %c0_18 = arith.constant 0 : index
    %23 = vector.load %arg8[%c0_17, %c0_18] : memref<1x512xf32, #tpu.memory_space<vmem>>, vector<1x512xf32>
    tpu.vector_store %arg8[%c0_17, %c0_18], %22 {strides = array<i32>} : memref<1x512xf32, #tpu.memory_space<vmem>>, vector<1x512xf32>,
    return
  }
  func.func @transform_0(%arg0: i32) -> (i32, i32) {
    %c0_i32 = arith.constant 0 : i32
    %c0_i32_0 = arith.constant 0 : i32
    return %arg0, %c0_i32 : i32, i32
  }
  func.func @transform_1(%arg0: i32) -> (i32, i32) {
    %c0_i32 = arith.constant 0 : i32
    %c0_i32_0 = arith.constant 0 : i32
    %c0_i32_1 = arith.constant 0 : i32
    return %c0_i32, %c0_i32_0 : i32, i32
  }
  func.func @transform_2(%arg0: i32) -> (i32, i32) {
    %c0_i32 = arith.constant 0 : i32
    %c0_i32_0 = arith.constant 0 : i32
    %c0_i32_1 = arith.constant 0 : i32
    return %c0_i32, %c0_i32_0 : i32, i32
  }
  func.func @transform_3(%arg0: i32) -> (i32, i32) {
    %c0_i32 = arith.constant 0 : i32
    %c0_i32_0 = arith.constant 0 : i32
    %c0_i32_1 = arith.constant 0 : i32
    return %c0_i32, %c0_i32_0 : i32, i32
  }
  func.func @transform_4(%arg0: i32) -> (i32, i32) {
    %c0_i32 = arith.constant 0 : i32
    %c0_i32_0 = arith.constant 0 : i32
    %c0_i32_1 = arith.constant 0 : i32
    return %c0_i32, %c0_i32_0 : i32, i32
  }
  func.func @transform_5(%arg0: i32) -> (i32, i32) {
    %c0_i32 = arith.constant 0 : i32
    %c0_i32_0 = arith.constant 0 : i32
    %c0_i32_1 = arith.constant 0 : i32
    return %c0_i32, %c0_i32_0 : i32, i32
  }
  func.func @transform_6(%arg0: i32) -> (i32, i32) {
    %c0_i32 = arith.constant 0 : i32
    %c0_i32_0 = arith.constant 0 : i32
    %c0_i32_1 = arith.constant 0 : i32
    return %c0_i32, %c0_i32_0 : i32, i32
  }
  func.func @transform_7(%arg0: i32) -> (i32, i32) {
    %c0_i32 = arith.constant 0 : i32
    %c0_i32_0 = arith.constant 0 : i32
    return %c0_i32, %arg0 : i32, i32
  }
}

</mosaic_0001>

<llo_original>
// kernel: binary_classification_forward.1
$region0: #{binary_classification_forward.1}
  #allocation0 [shape = 'u32[]', space=smem, size = 0x4, offset = 0x4, fixed_abs, tag = 'smem constant byte address 0x4 - core index']
  #allocation1 [shape = 'u32[144,128]{1,0:T(1,128)}', space=vmem, size = 0x12000, scoped, tag = 'internal scratch']
  #allocation2 [shape = 'f32[1,1]{1,0:T(1,128)S(1)}', space=vmem, size = 0x200, scoped, tag = 'scoped memory for binary_classification_forward.1']
  %s0 = inlined_call_operand.vmem [shape: f32[1024,12], index: 0, kind: input, shape index: {}]
  %s1 = inlined_call_operand.vmem [shape: f32[64,12], index: 1, kind: input, shape index: {}]
  %s2 = inlined_call_operand.vmem [shape: f32[64,1], index: 2, kind: input, shape index: {}]
  %s3 = inlined_call_operand.vmem [shape: f32[64,64], index: 3, kind: input, shape index: {}]
  %s4 = inlined_call_operand.vmem [shape: f32[64,1], index: 4, kind: input, shape index: {}]
  %s5 = inlined_call_operand.vmem [shape: f32[64,1], index: 5, kind: input, shape index: {}]
  %s6 = inlined_call_operand.<no memory space> [shape: f32[1,1], index: 6, kind: input, shape index: {}]
  %s7 = inlined_call_operand.vmem [shape: f32[1,1024], index: 7, kind: output, shape index: {}]
  %s8 = sld [smem:[#allocation0]]
  $region61: #{binary_classification_forward.1} parent=0
    _
  %s10 = ssub.s32 1, %s8
  %s11 = scalar_select 0, %s10, %s8
  %v12 = vstv %s6
  %13 = vst [vmem:[#allocation2] sm:$0x1] %v12
  loop: start=0, step=1, limit=4
  $region2: #{binary_classification_forward.1} parent=0 // loop_pre_header
    _
  $region3: #{binary_classification_forward.1} parent=0 // loop_header
    %s15 = sphi 0, %s19
    %p16 = scmp.ge.s32.totalorder %s15, 4
    %s25 = sphi 0, %s27
    %s28 = sphi 0, %s25
    %s29 = sphi 0, %s28
    %s45 = sphi 0, %s29
    %s49 = sphi 0, %s49
    %s51 = sphi 0, %s49
    %s52 = sphi 0, %s51
    %s66 = sphi 0, %s52
    %s70 = sphi 0, %s70
    %s72 = sphi 0, %s70
    %s73 = sphi 0, %s72
    %s87 = sphi 0, %s73
    %s91 = sphi 0, %s91
    %s93 = sphi 0, %s91
    %s94 = sphi 0, %s93
    %s108 = sphi 0, %s94
    %s112 = sphi 0, %s112
    %s114 = sphi 0, %s112
    %s115 = sphi 0, %s114
    %s129 = sphi 0, %s115
    %s133 = sphi 0, %s133
    %s135 = sphi 0, %s133
    %s136 = sphi 0, %s135
    %s150 = sphi 0, %s136
    %s154 = sphi 0, %s154
    %s156 = sphi 0, %s154
    %s157 = sphi 0, %s156
    %s171 = sphi 0, %s157
    %s177 = sphi 0, %s179
    %s180 = sphi 0, %s177
    %s181 = sphi 0, %s180
    %s197 = sphi 0, %s181
  $region4: #{binary_classification_forward.1} parent=0 // loop_header_branch
    %18 = sbr.rel (%p16) target = $region8
  $region5: #{binary_classification_forward.1} parent=0 // loop_body
    %s20 = ssub.s32 %s15, 1
    %s21 = ssub.s32 %s15, 2
    %s22 = sadd.s32 %s15, 1
    %s23 = ssub.s32 %s15, %s22
    %p24 = scmp.eq.s32.totalorder %s23, 0
    %s26 = sadd.s32 %s25, 1
    %s27 = scalar_select %p24, %s25, %s26
    %p30 = pneg %p24
    %p31 = scmp.eq.s32.totalorder %s15, 1
    %p32 = por %p30, %p31
    %p33 = scmp.ne.s32.totalorder %s25, %s28
    %p34 = scmp.eq.s32.totalorder %s15, 0
    %p35 = por %p33, %p34
    %p36 = scmp.ne.s32.totalorder %s25, %s28
    %p37 = scmp.eq.s32.totalorder %s20, 1
    %p38 = por %p36, %p37
    %p39 = scmp.ne.s32.totalorder %s28, %s29
    %p40 = scmp.eq.s32.totalorder %s20, 0
    %p41 = por %p39, %p40
    %p42 = scmp.ne.s32.totalorder %s28, %s29
    %p43 = scmp.eq.s32.totalorder %s21, 1
    %p44 = por %p42, %p43
    %p46 = scmp.ne.s32.totalorder %s29, %s45
    %p47 = scmp.eq.s32.totalorder %s21, 0
    %p48 = por %p46, %p47
    %s50 = sadd.s32 %s49, 1
    %p53 = scmp.eq.s32.totalorder %s15, 1
    %p54 = scmp.ne.s32.totalorder %s49, %s51
    %p55 = scmp.eq.s32.totalorder %s15, 0
    %p56 = por %p54, %p55
    %p57 = scmp.ne.s32.totalorder %s49, %s51
    %p58 = scmp.eq.s32.totalorder %s20, 1
    %p59 = por %p57, %p58
    %p60 = scmp.ne.s32.totalorder %s51, %s52
    %p61 = scmp.eq.s32.totalorder %s20, 0
    %p62 = por %p60, %p61
    %p63 = scmp.ne.s32.totalorder %s51, %s52
    %p64 = scmp.eq.s32.totalorder %s21, 1
    %p65 = por %p63, %p64
    %p67 = scmp.ne.s32.totalorder %s52, %s66
    %p68 = scmp.eq.s32.totalorder %s21, 0
    %p69 = por %p67, %p68
    %s71 = sadd.s32 %s70, 1
    %p74 = scmp.eq.s32.totalorder %s15, 1
    %p75 = scmp.ne.s32.totalorder %s70, %s72
    %p76 = scmp.eq.s32.totalorder %s15, 0
    %p77 = por %p75, %p76
    %p78 = scmp.ne.s32.totalorder %s70, %s72
    %p79 = scmp.eq.s32.totalorder %s20, 1
    %p80 = por %p78, %p79
    %p81 = scmp.ne.s32.totalorder %s72, %s73
    %p82 = scmp.eq.s32.totalorder %s20, 0
    %p83 = por %p81, %p82
    %p84 = scmp.ne.s32.totalorder %s72, %s73
    %p85 = scmp.eq.s32.totalorder %s21, 1
    %p86 = por %p84, %p85
    %p88 = scmp.ne.s32.totalorder %s73, %s87
    %p89 = scmp.eq.s32.totalorder %s21, 0
    %p90 = por %p88, %p89
    %s92 = sadd.s32 %s91, 1
    %p95 = scmp.eq.s32.totalorder %s15, 1
    %p96 = scmp.ne.s32.totalorder %s91, %s93
    %p97 = scmp.eq.s32.totalorder %s15, 0
    %p98 = por %p96, %p97
    %p99 = scmp.ne.s32.totalorder %s91, %s93
    %p100 = scmp.eq.s32.totalorder %s20, 1
    %p101 = por %p99, %p100
    %p102 = scmp.ne.s32.totalorder %s93, %s94
    %p103 = scmp.eq.s32.totalorder %s20, 0
    %p104 = por %p102, %p103
    %p105 = scmp.ne.s32.totalorder %s93, %s94
    %p106 = scmp.eq.s32.totalorder %s21, 1
    %p107 = por %p105, %p106
    %p109 = scmp.ne.s32.totalorder %s94, %s108
    %p110 = scmp.eq.s32.totalorder %s21, 0
    %p111 = por %p109, %p110
    %s113 = sadd.s32 %s112, 1
    %p116 = scmp.eq.s32.totalorder %s15, 1
    %p117 = scmp.ne.s32.totalorder %s112, %s114
    %p118 = scmp.eq.s32.totalorder %s15, 0
    %p119 = por %p117, %p118
    %p120 = scmp.ne.s32.totalorder %s112, %s114
    %p121 = scmp.eq.s32.totalorder %s20, 1
    %p122 = por %p120, %p121
    %p123 = scmp.ne.s32.totalorder %s114, %s115
    %p124 = scmp.eq.s32.totalorder %s20, 0
    %p125 = por %p123, %p124
    %p126 = scmp.ne.s32.totalorder %s114, %s115
    %p127 = scmp.eq.s32.totalorder %s21, 1
    %p128 = por %p126, %p127
    %p130 = scmp.ne.s32.totalorder %s115, %s129
    %p131 = scmp.eq.s32.totalorder %s21, 0
    %p132 = por %p130, %p131
    %s134 = sadd.s32 %s133, 1
    %p137 = scmp.eq.s32.totalorder %s15, 1
    %p138 = scmp.ne.s32.totalorder %s133, %s135
    %p139 = scmp.eq.s32.totalorder %s15, 0
    %p140 = por %p138, %p139
    %p141 = scmp.ne.s32.totalorder %s133, %s135
    %p142 = scmp.eq.s32.totalorder %s20, 1
    %p143 = por %p141, %p142
    %p144 = scmp.ne.s32.totalorder %s135, %s136
    %p145 = scmp.eq.s32.totalorder %s20, 0
    %p146 = por %p144, %p145
    %p147 = scmp.ne.s32.totalorder %s135, %s136
    %p148 = scmp.eq.s32.totalorder %s21, 1
    %p149 = por %p147, %p148
    %p151 = scmp.ne.s32.totalorder %s136, %s150
    %p152 = scmp.eq.s32.totalorder %s21, 0
    %p153 = por %p151, %p152
    %s155 = sadd.s32 %s154, 1
    %p158 = scmp.eq.s32.totalorder %s15, 1
    %p159 = scmp.ne.s32.totalorder %s154, %s156
    %p160 = scmp.eq.s32.totalorder %s15, 0
    %p161 = por %p159, %p160
    %p162 = scmp.ne.s32.totalorder %s154, %s156
    %p163 = scmp.eq.s32.totalorder %s20, 1
    %p164 = por %p162, %p163
    %p165 = scmp.ne.s32.totalorder %s156, %s157
    %p166 = scmp.eq.s32.totalorder %s20, 0
    %p167 = por %p165, %p166
    %p168 = scmp.ne.s32.totalorder %s156, %s157
    %p169 = scmp.eq.s32.totalorder %s21, 1
    %p170 = por %p168, %p169
    %p172 = scmp.ne.s32.totalorder %s157, %s171
    %p173 = scmp.eq.s32.totalorder %s21, 0
    %p174 = por %p172, %p173
    %s175 = ssub.s32 %s15, %s22
    %p176 = scmp.eq.s32.totalorder %s175, 0
    %s178 = sadd.s32 %s177, 1
    %s179 = scalar_select %p176, %s177, %s178
    %p182 = pneg %p176
    %p183 = scmp.eq.s32.totalorder %s15, 1
    %p184 = por %p182, %p183
    %p185 = scmp.ne.s32.totalorder %s177, %s180
    %p186 = scmp.eq.s32.totalorder %s15, 0
    %p187 = por %p185, %p186
    %p188 = scmp.ne.s32.totalorder %s177, %s180
    %p189 = scmp.eq.s32.totalorder %s20, 1
    %p190 = por %p188, %p189
    %p191 = scmp.ne.s32.totalorder %s180, %s181
    %p192 = scmp.eq.s32.totalorder %s20, 0
    %p193 = por %p191, %p192
    %p194 = scmp.ne.s32.totalorder %s180, %s181
    %p195 = scmp.eq.s32.totalorder %s21, 1
    %p196 = por %p194, %p195
    %p198 = scmp.ne.s32.totalorder %s181, %s197
    %p199 = scmp.eq.s32.totalorder %s21, 0
    %p200 = por %p198, %p199
    %p201 = scmp.le.s32.totalorder 1, %s15
    %p202 = scmp.lt.s32.totalorder %s15, 3
    %p203 = pnand %p201, %p202
    %p204 = pneg %p203
    // Predicated region
    $region9: #{binary_classification_forward.1} parent=5 // pred_check
      _
    $region10: #{binary_classification_forward.1} parent=5 // pred_check_branch
      %206 = sbr.rel (%p203) target = $region12
    $region11: #{binary_classification_forward.1} parent=5 // pred_region
      %s207 = ssub.s32 %s15, 1
      // Predicated region
      $region13: #{binary_classification_forward.1} parent=11 // pred_check
        %p208 = pneg %p62
      $region14: #{binary_classification_forward.1} parent=11 // pred_check_branch
        %210 = sbr.rel (%p208) target = $region16
      $region15: #{binary_classification_forward.1} parent=11 // pred_region
        _
      $region16: #{binary_classification_forward.1} parent=11 // pred_fallthru
        _
      // Predicated region
      $region17: #{binary_classification_forward.1} parent=11 // pred_check
        %p211 = pneg %p83
      $region18: #{binary_classification_forward.1} parent=11 // pred_check_branch
        %213 = sbr.rel (%p211) target = $region20
      $region19: #{binary_classification_forward.1} parent=11 // pred_region
        _
      $region20: #{binary_classification_forward.1} parent=11 // pred_fallthru
        _
      // Predicated region
      $region21: #{binary_classification_forward.1} parent=11 // pred_check
        %p214 = pneg %p104
      $region22: #{binary_classification_forward.1} parent=11 // pred_check_branch
        %216 = sbr.rel (%p214) target = $region24
      $region23: #{binary_classification_forward.1} parent=11 // pred_region
        _
      $region24: #{binary_classification_forward.1} parent=11 // pred_fallthru
        _
      // Predicated region
      $region25: #{binary_classification_forward.1} parent=11 // pred_check
        %p217 = pneg %p125
      $region26: #{binary_classification_forward.1} parent=11 // pred_check_branch
        %219 = sbr.rel (%p217) target = $region28
      $region27: #{binary_classification_forward.1} parent=11 // pred_region
        _
      $region28: #{binary_classification_forward.1} parent=11 // pred_fallthru
        _
      // Predicated region
      $region29: #{binary_classification_forward.1} parent=11 // pred_check
        %p220 = pneg %p146
      $region30: #{binary_classification_forward.1} parent=11 // pred_check_branch
        %222 = sbr.rel (%p220) target = $region32
      $region31: #{binary_classification_forward.1} parent=11 // pred_region
        _
      $region32: #{binary_classification_forward.1} parent=11 // pred_fallthru
        _
      // Predicated region
      $region33: #{binary_classification_forward.1} parent=11 // pred_check
        %p223 = pneg %p167
      $region34: #{binary_classification_forward.1} parent=11 // pred_check_branch
        %225 = sbr.rel (%p223) target = $region36
      $region35: #{binary_classification_forward.1} parent=11 // pred_region
        _
      $region36: #{binary_classification_forward.1} parent=11 // pred_fallthru
        _
    $region12: #{binary_classification_forward.1} parent=5 // pred_fallthru
      _
    %p226 = scmp.lt.s32.totalorder %s15, 2
    // Predicated region
    $region37: #{binary_classification_forward.1} parent=5 // pred_check
      %p227 = pneg %p226
    $region38: #{binary_classification_forward.1} parent=5 // pred_check_branch
      %229 = sbr.rel (%p227) target = $region40
    $region39: #{binary_classification_forward.1} parent=5 // pred_region
      // Predicated region
      $region41: #{binary_classification_forward.1} parent=39 // pred_check
        %p230 = pneg %p35
      $region42: #{binary_classification_forward.1} parent=39 // pred_check_branch
        %232 = sbr.rel (%p230) target = $region44
      $region43: #{binary_classification_forward.1} parent=39 // pred_region
        %s233 = smul.u32 64, %s15
        %p234 = scmp.lt.s32.totalorder %s233, 127
        %s235 = scalar_select %p234, %s233, 127
        %s236 = smul.addr %s235, 8
        %s237 = scalar_lea.vmem %s0, %s236
        %s238 = smul.u32 64, %s15
      $region44: #{binary_classification_forward.1} parent=39 // pred_fallthru
        _
    $region40: #{binary_classification_forward.1} parent=5 // pred_fallthru
      _
    %p239 = scmp.le.s32.totalorder 1, %s15
    %p240 = scmp.lt.s32.totalorder %s15, 3
    %p241 = pnand %p239, %p240
    %p242 = pneg %p241
    // Predicated region
    $region45: #{binary_classification_forward.1} parent=5 // pred_check
      _
    $region46: #{binary_classification_forward.1} parent=5 // pred_check_branch
      %244 = sbr.rel (%p241) target = $region48
    $region47: #{binary_classification_forward.1} parent=5 // pred_region
      %s245 = ssub.s32 %s15, 1
      %s246 = smul.u32 64, %s20
      %p247 = scmp.lt.s32.totalorder %s246, 127
      %s248 = scalar_select %p247, %s246, 127
      %s249 = smul.addr %s248, 8
      %s250 = scalar_lea.vmem %s0, %s249
      %p251 = pneg %p41
      %p252 = pneg %p38
      %p253 = pneg %p62
      %p254 = pneg %p59
      %p255 = pneg %p83
      %p256 = pneg %p80
      %p257 = pneg %p104
      %p258 = pneg %p101
      %p259 = pneg %p125
      %p260 = pneg %p122
      %p261 = pneg %p146
      %p262 = pneg %p143
      %p263 = pneg %p167
      %p264 = pneg %p164
      %p265 = pneg %p193
      %p266 = pneg %p190
      %s267 = smul.u32 4, %s20
      %p268 = scmp.lt.s32.totalorder %s267, 7
      %s269 = scalar_select %p268, %s267, 7
      %s270 = scalar_lea.vmem %s7, %s269
      %s271 = smul.u32 64, %s20
      %p272 = scmp.lt.s32.totalorder %s271, 127
      %s273 = scalar_select %p272, %s271, 127
      %s274 = smul.addr %s273, 8
      %s275 = scalar_lea.vmem %s0, %s274
      %s276 = smul.u32 64, %s20
      %s277 = smul.u32 4, %s20
      %p278 = scmp.lt.s32.totalorder %s277, 7
      %s279 = scalar_select %p278, %s277, 7
      %s280 = scalar_lea.vmem %s7, %s279
      %s281 = smul.u32 4, %s20
      %v282 = vld [vmem:[%s275] sm:$0xff]
      %v283 = vld [vmem:[%s275 + $0x8] sm:$0xff]
      %v284 = vld [vmem:[%s275 + $0x10] sm:$0xff]
      %v285 = vld [vmem:[%s275 + $0x18] sm:$0xff]
      %v286 = vld [vmem:[%s275 + $0x20] sm:$0xff]
      %v287 = vld [vmem:[%s275 + $0x28] sm:$0xff]
      %v288 = vld [vmem:[%s275 + $0x30] sm:$0xff]
      %v289 = vld [vmem:[%s275 + $0x38] sm:$0xff]
      %v290 = vld [vmem:[%s275 + $0x40] sm:$0xff]
      %v291 = vld [vmem:[%s275 + $0x48] sm:$0xff]
      %v292 = vld [vmem:[%s275 + $0x50] sm:$0xff]
      %v293 = vld [vmem:[%s275 + $0x58] sm:$0xff]
      %v294 = vld [vmem:[%s275 + $0x60] sm:$0xff]
      %v295 = vld [vmem:[%s275 + $0x68] sm:$0xff]
      %v296 = vld [vmem:[%s275 + $0x70] sm:$0xff]
      %v297 = vld [vmem:[%s275 + $0x78] sm:$0xff]
      %v298 = vld [vmem:[%s275 + $0x80] sm:$0xff]
      %v299 = vld [vmem:[%s275 + $0x88] sm:$0xff]
      %v300 = vld [vmem:[%s275 + $0x90] sm:$0xff]
      %v301 = vld [vmem:[%s275 + $0x98] sm:$0xff]
      %v302 = vld [vmem:[%s275 + $0xa0] sm:$0xff]
      %v303 = vld [vmem:[%s275 + $0xa8] sm:$0xff]
      %v304 = vld [vmem:[%s275 + $0xb0] sm:$0xff]
      %v305 = vld [vmem:[%s275 + $0xb8] sm:$0xff]
      %v306 = vld [vmem:[%s275 + $0xc0] sm:$0xff]
      %v307 = vld [vmem:[%s275 + $0xc8] sm:$0xff]
      %v308 = vld [vmem:[%s275 + $0xd0] sm:$0xff]
      %v309 = vld [vmem:[%s275 + $0xd8] sm:$0xff]
      %v310 = vld [vmem:[%s275 + $0xe0] sm:$0xff]
      %v311 = vld [vmem:[%s275 + $0xe8] sm:$0xff]
      %v312 = vld [vmem:[%s275 + $0xf0] sm:$0xff]
      %v313 = vld [vmem:[%s275 + $0xf8] sm:$0xff]
      %v314 = vld [vmem:[%s275 + $0x100] sm:$0xff]
      %v315 = vld [vmem:[%s275 + $0x108] sm:$0xff]
      %v316 = vld [vmem:[%s275 + $0x110] sm:$0xff]
      %v317 = vld [vmem:[%s275 + $0x118] sm:$0xff]
      %v318 = vld [vmem:[%s275 + $0x120] sm:$0xff]
      %v319 = vld [vmem:[%s275 + $0x128] sm:$0xff]
      %v320 = vld [vmem:[%s275 + $0x130] sm:$0xff]
      %v321 = vld [vmem:[%s275 + $0x138] sm:$0xff]
      %v322 = vld [vmem:[%s275 + $0x140] sm:$0xff]
      %v323 = vld [vmem:[%s275 + $0x148] sm:$0xff]
      %v324 = vld [vmem:[%s275 + $0x150] sm:$0xff]
      %v325 = vld [vmem:[%s275 + $0x158] sm:$0xff]
      %v326 = vld [vmem:[%s275 + $0x160] sm:$0xff]
      %v327 = vld [vmem:[%s275 + $0x168] sm:$0xff]
      %v328 = vld [vmem:[%s275 + $0x170] sm:$0xff]
      %v329 = vld [vmem:[%s275 + $0x178] sm:$0xff]
      %v330 = vld [vmem:[%s275 + $0x180] sm:$0xff]
      %v331 = vld [vmem:[%s275 + $0x188] sm:$0xff]
      %v332 = vld [vmem:[%s275 + $0x190] sm:$0xff]
      %v333 = vld [vmem:[%s275 + $0x198] sm:$0xff]
      %v334 = vld [vmem:[%s275 + $0x1a0] sm:$0xff]
      %v335 = vld [vmem:[%s275 + $0x1a8] sm:$0xff]
      %v336 = vld [vmem:[%s275 + $0x1b0] sm:$0xff]
      %v337 = vld [vmem:[%s275 + $0x1b8] sm:$0xff]
      %v338 = vld [vmem:[%s275 + $0x1c0] sm:$0xff]
      %v339 = vld [vmem:[%s275 + $0x1c8] sm:$0xff]
      %v340 = vld [vmem:[%s275 + $0x1d0] sm:$0xff]
      %v341 = vld [vmem:[%s275 + $0x1d8] sm:$0xff]
      %v342 = vld [vmem:[%s275 + $0x1e0] sm:$0xff]
      %v343 = vld [vmem:[%s275 + $0x1e8] sm:$0xff]
      %v344 = vld [vmem:[%s275 + $0x1f0] sm:$0xff]
      %v345 = vld [vmem:[%s275 + $0x1f8] sm:$0xff]
      %v346 = vld [vmem:[%s1] sm:$0xff]
      %v347 = vld [vmem:[%s1 + $0x8] sm:$0xff]
      %v348 = vld [vmem:[%s1 + $0x10] sm:$0xff]
      %v349 = vld [vmem:[%s1 + $0x18] sm:$0xff]
      %v350 = vld [vmem:[%s1 + $0x20] sm:$0xff]
      %v351 = vld [vmem:[%s1 + $0x28] sm:$0xff]
      %v352 = vld [vmem:[%s1 + $0x30] sm:$0xff]
      %v353 = vld [vmem:[%s1 + $0x38] sm:$0xff]
      %v354 = vld [vmem:[%s2] sm:$0xff]
      %v355 = vld [vmem:[%s2 + $0x8] sm:$0xff]
      %v356 = vld [vmem:[%s2 + $0x10] sm:$0xff]
      %v357 = vld [vmem:[%s2 + $0x18] sm:$0xff]
      %v358 = vld [vmem:[%s2 + $0x20] sm:$0xff]
      %v359 = vld [vmem:[%s2 + $0x28] sm:$0xff]
      %v360 = vld [vmem:[%s2 + $0x30] sm:$0xff]
      %v361 = vld [vmem:[%s2 + $0x38] sm:$0xff]
      %363 = vset.pattern.permute.xlu0 0
      %364 = vperm.xlu0 %363, %v354
      %v365 = vpop.permute.xlu0 %364
      %368 = vset.pattern.permute.xlu0 0
      %369 = vperm.xlu0 %368, %v355
      %v370 = vpop.permute.xlu0 %369
      %373 = vset.pattern.permute.xlu0 0
      %374 = vperm.xlu0 %373, %v356
      %v375 = vpop.permute.xlu0 %374
      %378 = vset.pattern.permute.xlu0 0
      %379 = vperm.xlu0 %378, %v357
      %v380 = vpop.permute.xlu0 %379
      %383 = vset.pattern.permute.xlu0 0
      %384 = vperm.xlu0 %383, %v358
      %v385 = vpop.permute.xlu0 %384
      %388 = vset.pattern.permute.xlu0 0
      %389 = vperm.xlu0 %388, %v359
      %v390 = vpop.permute.xlu0 %389
      %393 = vset.pattern.permute.xlu0 0
      %394 = vperm.xlu0 %393, %v360
      %v395 = vpop.permute.xlu0 %394
      %398 = vset.pattern.permute.xlu0 0
      %399 = vperm.xlu0 %398, %v361
      %v400 = vpop.permute.xlu0 %399
      %vm402 = vcmask 97280
      %v404 = vsel %vm402, %v346, 0
      %v407 = vsel %vm402, %v347, 0
      %v410 = vsel %vm402, %v348, 0
      %v413 = vsel %vm402, %v349, 0
      %v416 = vsel %vm402, %v350, 0
      %v419 = vsel %vm402, %v351, 0
      %v422 = vsel %vm402, %v352, 0
      %v425 = vsel %vm402, %v353, 0
      %v428 = vsel %vm402, %v282, 0
      %v431 = vsel %vm402, %v283, 0
      %v434 = vsel %vm402, %v284, 0
      %v437 = vsel %vm402, %v285, 0
      %v440 = vsel %vm402, %v286, 0
      %v443 = vsel %vm402, %v287, 0
      %v446 = vsel %vm402, %v288, 0
      %v449 = vsel %vm402, %v289, 0
      %v452 = vsel %vm402, %v290, 0
      %v455 = vsel %vm402, %v291, 0
      %v458 = vsel %vm402, %v292, 0
      %v461 = vsel %vm402, %v293, 0
      %v464 = vsel %vm402, %v294, 0
      %v467 = vsel %vm402, %v295, 0
      %v470 = vsel %vm402, %v296, 0
      %v473 = vsel %vm402, %v297, 0
      %v476 = vsel %vm402, %v298, 0
      %v479 = vsel %vm402, %v299, 0
      %v482 = vsel %vm402, %v300, 0
      %v485 = vsel %vm402, %v301, 0
      %v488 = vsel %vm402, %v302, 0
      %v491 = vsel %vm402, %v303, 0
      %v494 = vsel %vm402, %v304, 0
      %v497 = vsel %vm402, %v305, 0
      %v500 = vsel %vm402, %v306, 0
      %v503 = vsel %vm402, %v307, 0
      %v506 = vsel %vm402, %v308, 0
      %v509 = vsel %vm402, %v309, 0
      %v512 = vsel %vm402, %v310, 0
      %v515 = vsel %vm402, %v311, 0
      %v518 = vsel %vm402, %v312, 0
      %v521 = vsel %vm402, %v313, 0
      %v524 = vsel %vm402, %v314, 0
      %v527 = vsel %vm402, %v315, 0
      %v530 = vsel %vm402, %v316, 0
      %v533 = vsel %vm402, %v317, 0
      %v536 = vsel %vm402, %v318, 0
      %v539 = vsel %vm402, %v319, 0
      %v542 = vsel %vm402, %v320, 0
      %v545 = vsel %vm402, %v321, 0
      %v548 = vsel %vm402, %v322, 0
      %v551 = vsel %vm402, %v323, 0
      %v554 = vsel %vm402, %v324, 0
      %v557 = vsel %vm402, %v325, 0
      %v560 = vsel %vm402, %v326, 0
      %v563 = vsel %vm402, %v327, 0
      %v566 = vsel %vm402, %v328, 0
      %v569 = vsel %vm402, %v329, 0
      %v572 = vsel %vm402, %v330, 0
      %v575 = vsel %vm402, %v331, 0
      %v578 = vsel %vm402, %v332, 0
      %v581 = vsel %vm402, %v333, 0
      %v584 = vsel %vm402, %v334, 0
      %v587 = vsel %vm402, %v335, 0
      %v590 = vsel %vm402, %v336, 0
      %v593 = vsel %vm402, %v337, 0
      %v596 = vsel %vm402, %v338, 0
      %v599 = vsel %vm402, %v339, 0
      %v602 = vsel %vm402, %v340, 0
      %v605 = vsel %vm402, %v341, 0
      %v608 = vsel %vm402, %v342, 0
      %v611 = vsel %vm402, %v343, 0
      %v614 = vsel %vm402, %v344, 0
      %v617 = vsel %vm402, %v345, 0
      %619 = vmatprep.subr.mxu0 0.0
      %620 = vmatpush1.xpose.msra.mxu0 %v428
      %621 = vmatprep.subr.mxu0 0.0
      %622 = vmatpush1.xpose.msra.mxu0 %v431
      %623 = vmatprep.subr.mxu0 0.0
      %624 = vmatpush1.xpose.msra.mxu0 %v434
      %625 = vmatprep.subr.mxu0 0.0
      %626 = vmatpush1.xpose.msra.mxu0 %v437
      %627 = vmatprep.subr.mxu0 0.0
      %628 = vmatpush1.xpose.msra.mxu0 %v440
      %629 = vmatprep.subr.mxu0 0.0
      %630 = vmatpush1.xpose.msra.mxu0 %v443
      %631 = vmatprep.subr.mxu0 0.0
      %632 = vmatpush1.xpose.msra.mxu0 %v446
      %633 = vmatprep.subr.mxu0 0.0
      %634 = vmatpush1.xpose.msra.mxu0 %v449
      %635 = vmatprep.subr.mxu0 0.0
      %636 = vmatpush1.xpose.msra.mxu0 %v452
      %637 = vmatprep.subr.mxu0 0.0
      %638 = vmatpush1.xpose.msra.mxu0 %v455
      %639 = vmatprep.subr.mxu0 0.0
      %640 = vmatpush1.xpose.msra.mxu0 %v458
      %641 = vmatprep.subr.mxu0 0.0
      %642 = vmatpush1.xpose.msra.mxu0 %v461
      %643 = vmatprep.subr.mxu0 0.0
      %644 = vmatpush1.xpose.msra.mxu0 %v464
      %645 = vmatprep.subr.mxu0 0.0
      %646 = vmatpush1.xpose.msra.mxu0 %v467
      %647 = vmatprep.subr.mxu0 0.0
      %648 = vmatpush1.xpose.msra.mxu0 %v470
      %649 = vmatprep.subr.mxu0 0.0
      %650 = vmatpush1.xpose.msra.mxu0 %v473
      %651 = vmatprep.subr.mxu0 0.0
      %652 = vmatpush1.xpose.msra.mxu0 %v476
      %653 = vmatprep.subr.mxu0 0.0
      %654 = vmatpush1.xpose.msra.mxu0 %v479
      %655 = vmatprep.subr.mxu0 0.0
      %656 = vmatpush1.xpose.msra.mxu0 %v482
      %657 = vmatprep.subr.mxu0 0.0
      %658 = vmatpush1.xpose.msra.mxu0 %v485
      %659 = vmatprep.subr.mxu0 0.0
      %660 = vmatpush1.xpose.msra.mxu0 %v488
      %661 = vmatprep.subr.mxu0 0.0
      %662 = vmatpush1.xpose.msra.mxu0 %v491
      %663 = vmatprep.subr.mxu0 0.0
      %664 = vmatpush1.xpose.msra.mxu0 %v494
      %665 = vmatprep.subr.mxu0 0.0
      %666 = vmatpush1.xpose.msra.mxu0 %v497
      %667 = vmatprep.subr.mxu0 0.0
      %668 = vmatpush1.xpose.msra.mxu0 %v500
      %669 = vmatprep.subr.mxu0 0.0
      %670 = vmatpush1.xpose.msra.mxu0 %v503
      %671 = vmatprep.subr.mxu0 0.0
      %672 = vmatpush1.xpose.msra.mxu0 %v506
      %673 = vmatprep.subr.mxu0 0.0
      %674 = vmatpush1.xpose.msra.mxu0 %v509
      %675 = vmatprep.subr.mxu0 0.0
      %676 = vmatpush1.xpose.msra.mxu0 %v512
      %677 = vmatprep.subr.mxu0 0.0
      %678 = vmatpush1.xpose.msra.mxu0 %v515
      %679 = vmatprep.subr.mxu0 0.0
      %680 = vmatpush1.xpose.msra.mxu0 %v518
      %681 = vmatprep.subr.mxu0 0.0
      %682 = vmatpush1.xpose.msra.mxu0 %v521
      %683 = vmatprep.mubr.f32.mxu0 0.0
      %684 = vmatmul.mubr.f32.gmra.mrb[0].mxu0 %v404
      %v685 = vpop.f32.mrb[0].mxu0
      %v686 = vadd.f32 %v365, %v685
      %v687 = vpop.f32.mrb[0].mxu0
      %v688 = vadd.f32 %v365, %v687
      %689 = vmatprep.mubr.f32.mxu0 0.0
      %690 = vmatmul.mubr.f32.gmra.mrb[0].mxu0 %v407
      %v691 = vpop.f32.mrb[0].mxu0
      %v692 = vadd.f32 %v370, %v691
      %v693 = vpop.f32.mrb[0].mxu0
      %v694 = vadd.f32 %v370, %v693
      %695 = vmatprep.mubr.f32.mxu0 0.0
      %696 = vmatmul.mubr.f32.gmra.mrb[0].mxu0 %v410
      %v697 = vpop.f32.mrb[0].mxu0
      %v698 = vadd.f32 %v375, %v697
      %v699 = vpop.f32.mrb[0].mxu0
      %v700 = vadd.f32 %v375, %v699
      %701 = vmatprep.mubr.f32.mxu0 0.0
      %702 = vmatmul.mubr.f32.gmra.mrb[0].mxu0 %v413
      %v703 = vpop.f32.mrb[0].mxu0
      %v704 = vadd.f32 %v380, %v703
      %v705 = vpop.f32.mrb[0].mxu0
      %v706 = vadd.f32 %v380, %v705
      %707 = vmatprep.mubr.f32.mxu0 0.0
      %708 = vmatmul.mubr.f32.gmra.mrb[0].mxu0 %v416
      %v709 = vpop.f32.mrb[0].mxu0
      %v710 = vadd.f32 %v385, %v709
      %v711 = vpop.f32.mrb[0].mxu0
      %v712 = vadd.f32 %v385, %v711
      %713 = vmatprep.mubr.f32.mxu0 0.0
      %714 = vmatmul.mubr.f32.gmra.mrb[0].mxu0 %v419
      %v715 = vpop.f32.mrb[0].mxu0
      %v716 = vadd.f32 %v390, %v715
      %v717 = vpop.f32.mrb[0].mxu0
      %v718 = vadd.f32 %v390, %v717
      %719 = vmatprep.mubr.f32.mxu0 0.0
      %720 = vmatmul.mubr.f32.gmra.mrb[0].mxu0 %v422
      %v721 = vpop.f32.mrb[0].mxu0
      %v722 = vadd.f32 %v395, %v721
      %v723 = vpop.f32.mrb[0].mxu0
      %v724 = vadd.f32 %v395, %v723
      %725 = vmatprep.mubr.f32.mxu0 0.0
      %726 = vmatmul.mubr.f32.gmra.mrb[0].mxu0 %v425
      %v727 = vpop.f32.mrb[0].mxu0
      %v728 = vadd.f32 %v400, %v727
      %v729 = vpop.f32.mrb[0].mxu0
      %v730 = vadd.f32 %v400, %v729
      %731 = vdwg.mxu0
      %732 = vmatprep.subr.mxu0 0.0
      %733 = vmatpush1.xpose.msra.mxu0 %v524
      %734 = vmatprep.subr.mxu0 0.0
      %735 = vmatpush1.xpose.msra.mxu0 %v527
      %736 = vmatprep.subr.mxu0 0.0
      %737 = vmatpush1.xpose.msra.mxu0 %v530
      %738 = vmatprep.subr.mxu0 0.0
      %739 = vmatpush1.xpose.msra.mxu0 %v533
      %740 = vmatprep.subr.mxu0 0.0
      %741 = vmatpush1.xpose.msra.mxu0 %v536
      %742 = vmatprep.subr.mxu0 0.0
      %743 = vmatpush1.xpose.msra.mxu0 %v539
      %744 = vmatprep.subr.mxu0 0.0
      %745 = vmatpush1.xpose.msra.mxu0 %v542
      %746 = vmatprep.subr.mxu0 0.0
      %747 = vmatpush1.xpose.msra.mxu0 %v545
      %748 = vmatprep.subr.mxu0 0.0
      %749 = vmatpush1.xpose.msra.mxu0 %v548
      %750 = vmatprep.subr.mxu0 0.0
      %751 = vmatpush1.xpose.msra.mxu0 %v551
      %752 = vmatprep.subr.mxu0 0.0
      %753 = vmatpush1.xpose.msra.mxu0 %v554
      %754 = vmatprep.subr.mxu0 0.0
      %755 = vmatpush1.xpose.msra.mxu0 %v557
      %756 = vmatprep.subr.mxu0 0.0
      %757 = vmatpush1.xpose.msra.mxu0 %v560
      %758 = vmatprep.subr.mxu0 0.0
      %759 = vmatpush1.xpose.msra.mxu0 %v563
      %760 = vmatprep.subr.mxu0 0.0
      %761 = vmatpush1.xpose.msra.mxu0 %v566
      %762 = vmatprep.subr.mxu0 0.0
      %763 = vmatpush1.xpose.msra.mxu0 %v569
      %764 = vmatprep.subr.mxu0 0.0
      %765 = vmatpush1.xpose.msra.mxu0 %v572
      %766 = vmatprep.subr.mxu0 0.0
      %767 = vmatpush1.xpose.msra.mxu0 %v575
      %768 = vmatprep.subr.mxu0 0.0
      %769 = vmatpush1.xpose.msra.mxu0 %v578
      %770 = vmatprep.subr.mxu0 0.0
      %771 = vmatpush1.xpose.msra.mxu0 %v581
      %772 = vmatprep.subr.mxu0 0.0
      %773 = vmatpush1.xpose.msra.mxu0 %v584
      %774 = vmatprep.subr.mxu0 0.0
      %775 = vmatpush1.xpose.msra.mxu0 %v587
      %776 = vmatprep.subr.mxu0 0.0
      %777 = vmatpush1.xpose.msra.mxu0 %v590
      %778 = vmatprep.subr.mxu0 0.0
      %779 = vmatpush1.xpose.msra.mxu0 %v593
      %780 = vmatprep.subr.mxu0 0.0
      %781 = vmatpush1.xpose.msra.mxu0 %v596
      %782 = vmatprep.subr.mxu0 0.0
      %783 = vmatpush1.xpose.msra.mxu0 %v599
      %784 = vmatprep.subr.mxu0 0.0
      %785 = vmatpush1.xpose.msra.mxu0 %v602
      %786 = vmatprep.subr.mxu0 0.0
      %787 = vmatpush1.xpose.msra.mxu0 %v605
      %788 = vmatprep.subr.mxu0 0.0
      %789 = vmatpush1.xpose.msra.mxu0 %v608
      %790 = vmatprep.subr.mxu0 0.0
      %791 = vmatpush1.xpose.msra.mxu0 %v611
      %792 = vmatprep.subr.mxu0 0.0
      %793 = vmatpush1.xpose.msra.mxu0 %v614
      %794 = vmatprep.subr.mxu0 0.0
      %795 = vmatpush1.xpose.msra.mxu0 %v617
      %796 = vmatprep.mubr.f32.mxu0 0.0
      %797 = vmatmul.mubr.f32.gmra.mrb[0].mxu0 %v404
      %v798 = vpop.f32.mrb[0].mxu0
      %v799 = vadd.f32 %v365, %v798
      %v800 = vpop.f32.mrb[0].mxu0
      %v801 = vadd.f32 %v365, %v800
      %802 = vmatprep.mubr.f32.mxu0 0.0
      %803 = vmatmul.mubr.f32.gmra.mrb[0].mxu0 %v407
      %v804 = vpop.f32.mrb[0].mxu0
      %v805 = vadd.f32 %v370, %v804
      %v806 = vpop.f32.mrb[0].mxu0
      %v807 = vadd.f32 %v370, %v806
      %808 = vmatprep.mubr.f32.mxu0 0.0
      %809 = vmatmul.mubr.f32.gmra.mrb[0].mxu0 %v410
      %v810 = vpop.f32.mrb[0].mxu0
      %v811 = vadd.f32 %v375, %v810
      %v812 = vpop.f32.mrb[0].mxu0
      %v813 = vadd.f32 %v375, %v812
      %814 = vmatprep.mubr.f32.mxu0 0.0
      %815 = vmatmul.mubr.f32.gmra.mrb[0].mxu0 %v413
      %v816 = vpop.f32.mrb[0].mxu0
      %v817 = vadd.f32 %v380, %v816
      %v818 = vpop.f32.mrb[0].mxu0
      %v819 = vadd.f32 %v380, %v818
      %820 = vmatprep.mubr.f32.mxu0 0.0
      %821 = vmatmul.mubr.f32.gmra.mrb[0].mxu0 %v416
      %v822 = vpop.f32.mrb[0].mxu0
      %v823 = vadd.f32 %v385, %v822
      %v824 = vpop.f32.mrb[0].mxu0
      %v825 = vadd.f32 %v385, %v824
      %826 = vmatprep.mubr.f32.mxu0 0.0
      %827 = vmatmul.mubr.f32.gmra.mrb[0].mxu0 %v419
      %v828 = vpop.f32.mrb[0].mxu0
      %v829 = vadd.f32 %v390, %v828
      %v830 = vpop.f32.mrb[0].mxu0
      %v831 = vadd.f32 %v390, %v830
      %832 = vmatprep.mubr.f32.mxu0 0.0
      %833 = vmatmul.mubr.f32.gmra.mrb[0].mxu0 %v422
      %v834 = vpop.f32.mrb[0].mxu0
      %v835 = vadd.f32 %v395, %v834
      %v836 = vpop.f32.mrb[0].mxu0
      %v837 = vadd.f32 %v395, %v836
      %838 = vmatprep.mubr.f32.mxu0 0.0
      %839 = vmatmul.mubr.f32.gmra.mrb[0].mxu0 %v425
      %v840 = vpop.f32.mrb[0].mxu0
      %v841 = vadd.f32 %v400, %v840
      %v842 = vpop.f32.mrb[0].mxu0
      %v843 = vadd.f32 %v400, %v842
      %844 = vdwg.mxu0
      %v845 = vmax.f32 %v686, 0.0
      %v846 = vmax.f32 %v688, 0.0
      %v847 = vmax.f32 %v799, 0.0
      %v848 = vmax.f32 %v801, 0.0
      %v849 = vmax.f32 %v692, 0.0
      %v850 = vmax.f32 %v694, 0.0
      %v851 = vmax.f32 %v805, 0.0
      %v852 = vmax.f32 %v807, 0.0
      %v853 = vmax.f32 %v698, 0.0
      %v854 = vmax.f32 %v700, 0.0
      %v855 = vmax.f32 %v811, 0.0
      %v856 = vmax.f32 %v813, 0.0
      %v857 = vmax.f32 %v704, 0.0
      %v858 = vmax.f32 %v706, 0.0
      %v859 = vmax.f32 %v817, 0.0
      %v860 = vmax.f32 %v819, 0.0
      %v861 = vmax.f32 %v710, 0.0
      %v862 = vmax.f32 %v712, 0.0
      %v863 = vmax.f32 %v823, 0.0
      %v864 = vmax.f32 %v825, 0.0
      %v865 = vmax.f32 %v716, 0.0
      %v866 = vmax.f32 %v718, 0.0
      %v867 = vmax.f32 %v829, 0.0
      %v868 = vmax.f32 %v831, 0.0
      %v869 = vmax.f32 %v722, 0.0
      %v870 = vmax.f32 %v724, 0.0
      %v871 = vmax.f32 %v835, 0.0
      %v872 = vmax.f32 %v837, 0.0
      %v873 = vmax.f32 %v728, 0.0
      %v874 = vmax.f32 %v730, 0.0
      %v875 = vmax.f32 %v841, 0.0
      %v876 = vmax.f32 %v843, 0.0
      %v877 = vld [vmem:[%s3] sm:$0xff]
      %v878 = vld [vmem:[%s3 + $0x8] sm:$0xff]
      %v879 = vld [vmem:[%s3 + $0x10] sm:$0xff]
      %v880 = vld [vmem:[%s3 + $0x18] sm:$0xff]
      %v881 = vld [vmem:[%s3 + $0x20] sm:$0xff]
      %v882 = vld [vmem:[%s3 + $0x28] sm:$0xff]
      %v883 = vld [vmem:[%s3 + $0x30] sm:$0xff]
      %v884 = vld [vmem:[%s3 + $0x38] sm:$0xff]
      %v885 = vld [vmem:[%s4] sm:$0xff]
      %v886 = vld [vmem:[%s4 + $0x8] sm:$0xff]
      %v887 = vld [vmem:[%s4 + $0x10] sm:$0xff]
      %v888 = vld [vmem:[%s4 + $0x18] sm:$0xff]
      %v889 = vld [vmem:[%s4 + $0x20] sm:$0xff]
      %v890 = vld [vmem:[%s4 + $0x28] sm:$0xff]
      %v891 = vld [vmem:[%s4 + $0x30] sm:$0xff]
      %v892 = vld [vmem:[%s4 + $0x38] sm:$0xff]
      %894 = vset.pattern.permute.xlu0 0
      %895 = vperm.xlu0 %894, %v885
      %v896 = vpop.permute.xlu0 %895
      %899 = vset.pattern.permute.xlu0 0
      %900 = vperm.xlu0 %899, %v886
      %v901 = vpop.permute.xlu0 %900
      %904 = vset.pattern.permute.xlu0 0
      %905 = vperm.xlu0 %904, %v887
      %v906 = vpop.permute.xlu0 %905
      %909 = vset.pattern.permute.xlu0 0
      %910 = vperm.xlu0 %909, %v888
      %v911 = vpop.permute.xlu0 %910
      %914 = vset.pattern.permute.xlu0 0
      %915 = vperm.xlu0 %914, %v889
      %v916 = vpop.permute.xlu0 %915
      %919 = vset.pattern.permute.xlu0 0
      %920 = vperm.xlu0 %919, %v890
      %v921 = vpop.permute.xlu0 %920
      %924 = vset.pattern.permute.xlu0 0
      %925 = vperm.xlu0 %924, %v891
      %v926 = vpop.permute.xlu0 %925
      %929 = vset.pattern.permute.xlu0 0
      %930 = vperm.xlu0 %929, %v892
      %v931 = vpop.permute.xlu0 %930
      %vm933 = vcmask 523264
      %v935 = vsel %vm933, %v877, 0
      %v938 = vsel %vm933, %v878, 0
      %v941 = vsel %vm933, %v879, 0
      %v944 = vsel %vm933, %v880, 0
      %v947 = vsel %vm933, %v881, 0
      %v950 = vsel %vm933, %v882, 0
      %v953 = vsel %vm933, %v883, 0
      %v956 = vsel %vm933, %v884, 0
      %958 = vmatprep.subr.mxu0 %v846
      %959 = vmatpush1.msra.mxu0 %v845
      %960 = vmatprep.subr.mxu0 %v850
      %961 = vmatpush1.msra.mxu0 %v849
      %962 = vmatprep.subr.mxu0 %v854
      %963 = vmatpush1.msra.mxu0 %v853
      %964 = vmatprep.subr.mxu0 %v858
      %965 = vmatpush1.msra.mxu0 %v857
      %966 = vmatprep.subr.mxu0 %v862
      %967 = vmatpush1.msra.mxu0 %v861
      %968 = vmatprep.subr.mxu0 %v866
      %969 = vmatpush1.msra.mxu0 %v865
      %970 = vmatprep.subr.mxu0 %v870
      %971 = vmatpush1.msra.mxu0 %v869
      %972 = vmatprep.subr.mxu0 %v874
      %973 = vmatpush1.msra.mxu0 %v873
      %974 = vmatprep.subr.mxu0 0.0
      %975 = vmatpush1.msra.mxu0 0.0
      %976 = vmatprep.subr.mxu0 0.0
      %977 = vmatpush1.msra.mxu0 0.0
      %978 = vmatprep.subr.mxu0 0.0
      %979 = vmatpush1.msra.mxu0 0.0
      %980 = vmatprep.subr.mxu0 0.0
      %981 = vmatpush1.msra.mxu0 0.0
      %982 = vmatprep.subr.mxu0 0.0
      %983 = vmatpush1.msra.mxu0 0.0
      %984 = vmatprep.subr.mxu0 0.0
      %985 = vmatpush1.msra.mxu0 0.0
      %986 = vmatprep.subr.mxu0 0.0
      %987 = vmatpush1.msra.mxu0 0.0
      %988 = vmatprep.subr.mxu0 0.0
      %989 = vmatpush1.msra.mxu0 0.0
      %990 = vmatprep.subr.mxu0 0.0
      %991 = vmatpush1.msra.mxu0 0.0
      %992 = vmatprep.subr.mxu0 0.0
      %993 = vmatpush1.msra.mxu0 0.0
      %994 = vmatprep.subr.mxu0 0.0
      %995 = vmatpush1.msra.mxu0 0.0
      %996 = vmatprep.subr.mxu0 0.0
      %997 = vmatpush1.msra.mxu0 0.0
      %998 = vmatprep.subr.mxu0 0.0
      %999 = vmatpush1.msra.mxu0 0.0
      %1000 = vmatprep.subr.mxu0 0.0
      %1001 = vmatpush1.msra.mxu0 0.0
      %1002 = vmatprep.subr.mxu0 0.0
      %1003 = vmatpush1.msra.mxu0 0.0
      %1004 = vmatprep.subr.mxu0 0.0
      %1005 = vmatpush1.msra.mxu0 0.0
      %1006 = vmatprep.subr.mxu0 0.0
      %1007 = vmatpush1.msra.mxu0 0.0
      %1008 = vmatprep.subr.mxu0 0.0
      %1009 = vmatpush1.msra.mxu0 0.0
      %1010 = vmatprep.subr.mxu0 0.0
      %1011 = vmatpush1.msra.mxu0 0.0
      %1012 = vmatprep.subr.mxu0 0.0
      %1013 = vmatpush1.msra.mxu0 0.0
      %1014 = vmatprep.subr.mxu0 0.0
      %1015 = vmatpush1.msra.mxu0 0.0
      %1016 = vmatprep.subr.mxu0 0.0
      %1017 = vmatpush1.msra.mxu0 0.0
      %1018 = vmatprep.subr.mxu0 0.0
      %1019 = vmatpush1.msra.mxu0 0.0
      %1020 = vmatprep.subr.mxu0 0.0
      %1021 = vmatpush1.msra.mxu0 0.0
      %1022 = vmatprep.mubr.f32.mxu0 0.0
      %1023 = vmatmul.mubr.f32.gmra.mrb[0].mxu0 %v935
      %v1024 = vpop.f32.mrb[0].mxu0
      %v1025 = vadd.f32 %v896, %v1024
      %v1026 = vpop.f32.mrb[0].mxu0
      %v1027 = vadd.f32 %v896, %v1026
      %1028 = vmatprep.mubr.f32.mxu0 0.0
      %1029 = vmatmul.mubr.f32.gmra.mrb[0].mxu0 %v938
      %v1030 = vpop.f32.mrb[0].mxu0
      %v1031 = vadd.f32 %v901, %v1030
      %v1032 = vpop.f32.mrb[0].mxu0
      %v1033 = vadd.f32 %v901, %v1032
      %1034 = vmatprep.mubr.f32.mxu0 0.0
      %1035 = vmatmul.mubr.f32.gmra.mrb[0].mxu0 %v941
      %v1036 = vpop.f32.mrb[0].mxu0
      %v1037 = vadd.f32 %v906, %v1036
      %v1038 = vpop.f32.mrb[0].mxu0
      %v1039 = vadd.f32 %v906, %v1038
      %1040 = vmatprep.mubr.f32.mxu0 0.0
      %1041 = vmatmul.mubr.f32.gmra.mrb[0].mxu0 %v944
      %v1042 = vpop.f32.mrb[0].mxu0
      %v1043 = vadd.f32 %v911, %v1042
      %v1044 = vpop.f32.mrb[0].mxu0
      %v1045 = vadd.f32 %v911, %v1044
      %1046 = vmatprep.mubr.f32.mxu0 0.0
      %1047 = vmatmul.mubr.f32.gmra.mrb[0].mxu0 %v947
      %v1048 = vpop.f32.mrb[0].mxu0
      %v1049 = vadd.f32 %v916, %v1048
      %v1050 = vpop.f32.mrb[0].mxu0
      %v1051 = vadd.f32 %v916, %v1050
      %1052 = vmatprep.mubr.f32.mxu0 0.0
      %1053 = vmatmul.mubr.f32.gmra.mrb[0].mxu0 %v950
      %v1054 = vpop.f32.mrb[0].mxu0
      %v1055 = vadd.f32 %v921, %v1054
      %v1056 = vpop.f32.mrb[0].mxu0
      %v1057 = vadd.f32 %v921, %v1056
      %1058 = vmatprep.mubr.f32.mxu0 0.0
      %1059 = vmatmul.mubr.f32.gmra.mrb[0].mxu0 %v953
      %v1060 = vpop.f32.mrb[0].mxu0
      %v1061 = vadd.f32 %v926, %v1060
      %v1062 = vpop.f32.mrb[0].mxu0
      %v1063 = vadd.f32 %v926, %v1062
      %1064 = vmatprep.mubr.f32.mxu0 0.0
      %1065 = vmatmul.mubr.f32.gmra.mrb[0].mxu0 %v956
      %v1066 = vpop.f32.mrb[0].mxu0
      %v1067 = vadd.f32 %v931, %v1066
      %v1068 = vpop.f32.mrb[0].mxu0
      %v1069 = vadd.f32 %v931, %v1068
      %1070 = vdwg.mxu0
      %1071 = vmatprep.subr.mxu0 %v848
      %1072 = vmatpush1.msra.mxu0 %v847
      %1073 = vmatprep.subr.mxu0 %v852
      %1074 = vmatpush1.msra.mxu0 %v851
      %1075 = vmatprep.subr.mxu0 %v856
      %1076 = vmatpush1.msra.mxu0 %v855
      %1077 = vmatprep.subr.mxu0 %v860
      %1078 = vmatpush1.msra.mxu0 %v859
      %1079 = vmatprep.subr.mxu0 %v864
      %1080 = vmatpush1.msra.mxu0 %v863
      %1081 = vmatprep.subr.mxu0 %v868
      %1082 = vmatpush1.msra.mxu0 %v867
      %1083 = vmatprep.subr.mxu0 %v872
      %1084 = vmatpush1.msra.mxu0 %v871
      %1085 = vmatprep.subr.mxu0 %v876
      %1086 = vmatpush1.msra.mxu0 %v875
      %1087 = vmatprep.subr.mxu0 0.0
      %1088 = vmatpush1.msra.mxu0 0.0
      %1089 = vmatprep.subr.mxu0 0.0
      %1090 = vmatpush1.msra.mxu0 0.0
      %1091 = vmatprep.subr.mxu0 0.0
      %1092 = vmatpush1.msra.mxu0 0.0
      %1093 = vmatprep.subr.mxu0 0.0
      %1094 = vmatpush1.msra.mxu0 0.0
      %1095 = vmatprep.subr.mxu0 0.0
      %1096 = vmatpush1.msra.mxu0 0.0
      %1097 = vmatprep.subr.mxu0 0.0
      %1098 = vmatpush1.msra.mxu0 0.0
      %1099 = vmatprep.subr.mxu0 0.0
      %1100 = vmatpush1.msra.mxu0 0.0
      %1101 = vmatprep.subr.mxu0 0.0
      %1102 = vmatpush1.msra.mxu0 0.0
      %1103 = vmatprep.subr.mxu0 0.0
      %1104 = vmatpush1.msra.mxu0 0.0
      %1105 = vmatprep.subr.mxu0 0.0
      %1106 = vmatpush1.msra.mxu0 0.0
      %1107 = vmatprep.subr.mxu0 0.0
      %1108 = vmatpush1.msra.mxu0 0.0
      %1109 = vmatprep.subr.mxu0 0.0
      %1110 = vmatpush1.msra.mxu0 0.0
      %1111 = vmatprep.subr.mxu0 0.0
      %1112 = vmatpush1.msra.mxu0 0.0
      %1113 = vmatprep.subr.mxu0 0.0
      %1114 = vmatpush1.msra.mxu0 0.0
      %1115 = vmatprep.subr.mxu0 0.0
      %1116 = vmatpush1.msra.mxu0 0.0
      %1117 = vmatprep.subr.mxu0 0.0
      %1118 = vmatpush1.msra.mxu0 0.0
      %1119 = vmatprep.subr.mxu0 0.0
      %1120 = vmatpush1.msra.mxu0 0.0
      %1121 = vmatprep.subr.mxu0 0.0
      %1122 = vmatpush1.msra.mxu0 0.0
      %1123 = vmatprep.subr.mxu0 0.0
      %1124 = vmatpush1.msra.mxu0 0.0
      %1125 = vmatprep.subr.mxu0 0.0
      %1126 = vmatpush1.msra.mxu0 0.0
      %1127 = vmatprep.subr.mxu0 0.0
      %1128 = vmatpush1.msra.mxu0 0.0
      %1129 = vmatprep.subr.mxu0 0.0
      %1130 = vmatpush1.msra.mxu0 0.0
      %1131 = vmatprep.subr.mxu0 0.0
      %1132 = vmatpush1.msra.mxu0 0.0
      %1133 = vmatprep.subr.mxu0 0.0
      %1134 = vmatpush1.msra.mxu0 0.0
      %1135 = vmatprep.mubr.f32.mxu0 0.0
      %1136 = vmatmul.mubr.f32.gmra.mrb[0].mxu0 %v935
      %v1137 = vpop.f32.mrb[0].mxu0
      %v1138 = vadd.f32 %v896, %v1137
      %v1139 = vpop.f32.mrb[0].mxu0
      %v1140 = vadd.f32 %v896, %v1139
      %1141 = vmatprep.mubr.f32.mxu0 0.0
      %1142 = vmatmul.mubr.f32.gmra.mrb[0].mxu0 %v938
      %v1143 = vpop.f32.mrb[0].mxu0
      %v1144 = vadd.f32 %v901, %v1143
      %v1145 = vpop.f32.mrb[0].mxu0
      %v1146 = vadd.f32 %v901, %v1145
      %1147 = vmatprep.mubr.f32.mxu0 0.0
      %1148 = vmatmul.mubr.f32.gmra.mrb[0].mxu0 %v941
      %v1149 = vpop.f32.mrb[0].mxu0
      %v1150 = vadd.f32 %v906, %v1149
      %v1151 = vpop.f32.mrb[0].mxu0
      %v1152 = vadd.f32 %v906, %v1151
      %1153 = vmatprep.mubr.f32.mxu0 0.0
      %1154 = vmatmul.mubr.f32.gmra.mrb[0].mxu0 %v944
      %v1155 = vpop.f32.mrb[0].mxu0
      %v1156 = vadd.f32 %v911, %v1155
      %v1157 = vpop.f32.mrb[0].mxu0
      %v1158 = vadd.f32 %v911, %v1157
      %1159 = vmatprep.mubr.f32.mxu0 0.0
      %1160 = vmatmul.mubr.f32.gmra.mrb[0].mxu0 %v947
      %v1161 = vpop.f32.mrb[0].mxu0
      %v1162 = vadd.f32 %v916, %v1161
      %v1163 = vpop.f32.mrb[0].mxu0
      %v1164 = vadd.f32 %v916, %v1163
      %1165 = vmatprep.mubr.f32.mxu0 0.0
      %1166 = vmatmul.mubr.f32.gmra.mrb[0].mxu0 %v950
      %v1167 = vpop.f32.mrb[0].mxu0
      %v1168 = vadd.f32 %v921, %v1167
      %v1169 = vpop.f32.mrb[0].mxu0
      %v1170 = vadd.f32 %v921, %v1169
      %1171 = vmatprep.mubr.f32.mxu0 0.0
      %1172 = vmatmul.mubr.f32.gmra.mrb[0].mxu0 %v953
      %v1173 = vpop.f32.mrb[0].mxu0
      %v1174 = vadd.f32 %v926, %v1173
      %v1175 = vpop.f32.mrb[0].mxu0
      %v1176 = vadd.f32 %v926, %v1175
      %1177 = vmatprep.mubr.f32.mxu0 0.0
      %1178 = vmatmul.mubr.f32.gmra.mrb[0].mxu0 %v956
      %v1179 = vpop.f32.mrb[0].mxu0
      %v1180 = vadd.f32 %v931, %v1179
      %v1181 = vpop.f32.mrb[0].mxu0
      %v1182 = vadd.f32 %v931, %v1181
      %1183 = vdwg.mxu0
      %v1184 = vmax.f32 %v1025, 0.0
      %v1185 = vmax.f32 %v1027, 0.0
      %v1186 = vmax.f32 %v1138, 0.0
      %v1187 = vmax.f32 %v1140, 0.0
      %v1188 = vmax.f32 %v1031, 0.0
      %v1189 = vmax.f32 %v1033, 0.0
      %v1190 = vmax.f32 %v1144, 0.0
      %v1191 = vmax.f32 %v1146, 0.0
      %v1192 = vmax.f32 %v1037, 0.0
      %v1193 = vmax.f32 %v1039, 0.0
      %v1194 = vmax.f32 %v1150, 0.0
      %v1195 = vmax.f32 %v1152, 0.0
      %v1196 = vmax.f32 %v1043, 0.0
      %v1197 = vmax.f32 %v1045, 0.0
      %v1198 = vmax.f32 %v1156, 0.0
      %v1199 = vmax.f32 %v1158, 0.0
      %v1200 = vmax.f32 %v1049, 0.0
      %v1201 = vmax.f32 %v1051, 0.0
      %v1202 = vmax.f32 %v1162, 0.0
      %v1203 = vmax.f32 %v1164, 0.0
      %v1204 = vmax.f32 %v1055, 0.0
      %v1205 = vmax.f32 %v1057, 0.0
      %v1206 = vmax.f32 %v1168, 0.0
      %v1207 = vmax.f32 %v1170, 0.0
      %v1208 = vmax.f32 %v1061, 0.0
      %v1209 = vmax.f32 %v1063, 0.0
      %v1210 = vmax.f32 %v1174, 0.0
      %v1211 = vmax.f32 %v1176, 0.0
      %v1212 = vmax.f32 %v1067, 0.0
      %v1213 = vmax.f32 %v1069, 0.0
      %v1214 = vmax.f32 %v1180, 0.0
      %v1215 = vmax.f32 %v1182, 0.0
      %v1216 = vld [vmem:[%s5] sm:$0xff]
      %v1217 = vld [vmem:[%s5 + $0x8] sm:$0xff]
      %v1218 = vld [vmem:[%s5 + $0x10] sm:$0xff]
      %v1219 = vld [vmem:[%s5 + $0x18] sm:$0xff]
      %v1220 = vld [vmem:[%s5 + $0x20] sm:$0xff]
      %v1221 = vld [vmem:[%s5 + $0x28] sm:$0xff]
      %v1222 = vld [vmem:[%s5 + $0x30] sm:$0xff]
      %v1223 = vld [vmem:[%s5 + $0x38] sm:$0xff]
      %1225 = vset.pattern.permute.xlu0 0
      %1226 = vperm.xlu0 %1225, %v1216
      %v1227 = vpop.permute.xlu0 %1226
      %1230 = vset.pattern.permute.xlu0 0
      %1231 = vperm.xlu0 %1230, %v1217
      %v1232 = vpop.permute.xlu0 %1231
      %1235 = vset.pattern.permute.xlu0 0
      %1236 = vperm.xlu0 %1235, %v1218
      %v1237 = vpop.permute.xlu0 %1236
      %1240 = vset.pattern.permute.xlu0 0
      %1241 = vperm.xlu0 %1240, %v1219
      %v1242 = vpop.permute.xlu0 %1241
      %1245 = vset.pattern.permute.xlu0 0
      %1246 = vperm.xlu0 %1245, %v1220
      %v1247 = vpop.permute.xlu0 %1246
      %1250 = vset.pattern.permute.xlu0 0
      %1251 = vperm.xlu0 %1250, %v1221
      %v1252 = vpop.permute.xlu0 %1251
      %1255 = vset.pattern.permute.xlu0 0
      %1256 = vperm.xlu0 %1255, %v1222
      %v1257 = vpop.permute.xlu0 %1256
      %1260 = vset.pattern.permute.xlu0 0
      %1261 = vperm.xlu0 %1260, %v1223
      %v1262 = vpop.permute.xlu0 %1261
      %v1264 = vmul.f32 %v1184, %v1227
      %v1265 = vmul.f32 %v1185, %v1227
      %v1266 = vmul.f32 %v1186, %v1227
      %v1267 = vmul.f32 %v1187, %v1227
      %v1268 = vmul.f32 %v1188, %v1232
      %v1269 = vmul.f32 %v1189, %v1232
      %v1270 = vmul.f32 %v1190, %v1232
      %v1271 = vmul.f32 %v1191, %v1232
      %v1272 = vmul.f32 %v1192, %v1237
      %v1273 = vmul.f32 %v1193, %v1237
      %v1274 = vmul.f32 %v1194, %v1237
      %v1275 = vmul.f32 %v1195, %v1237
      %v1276 = vmul.f32 %v1196, %v1242
      %v1277 = vmul.f32 %v1197, %v1242
      %v1278 = vmul.f32 %v1198, %v1242
      %v1279 = vmul.f32 %v1199, %v1242
      %v1280 = vmul.f32 %v1200, %v1247
      %v1281 = vmul.f32 %v1201, %v1247
      %v1282 = vmul.f32 %v1202, %v1247
      %v1283 = vmul.f32 %v1203, %v1247
      %v1284 = vmul.f32 %v1204, %v1252
      %v1285 = vmul.f32 %v1205, %v1252
      %v1286 = vmul.f32 %v1206, %v1252
      %v1287 = vmul.f32 %v1207, %v1252
      %v1288 = vmul.f32 %v1208, %v1257
      %v1289 = vmul.f32 %v1209, %v1257
      %v1290 = vmul.f32 %v1210, %v1257
      %v1291 = vmul.f32 %v1211, %v1257
      %v1292 = vmul.f32 %v1212, %v1262
      %v1293 = vmul.f32 %v1213, %v1262
      %v1294 = vmul.f32 %v1214, %v1262
      %v1295 = vmul.f32 %v1215, %v1262
      %v1296 = vadd.f32 %v1264, %v1268
      %v1297 = vadd.f32 %v1296, %v1272
      %v1298 = vadd.f32 %v1297, %v1276
      %v1299 = vadd.f32 %v1298, %v1280
      %v1300 = vadd.f32 %v1299, %v1284
      %v1301 = vadd.f32 %v1300, %v1288
      %v1302 = vadd.f32 %v1301, %v1292
      %v1303 = vrot.slane %v1302, 4
      %v1304 = vadd.f32 %v1302, %v1303
      %v1305 = vrot.slane %v1304, 2
      %v1306 = vadd.f32 %v1304, %v1305
      %v1307 = vrot.slane %v1306, 1
      %v1308 = vadd.f32 %v1306, %v1307
      %v1309 = vadd.f32 %v1265, %v1269
      %v1310 = vadd.f32 %v1309, %v1273
      %v1311 = vadd.f32 %v1310, %v1277
      %v1312 = vadd.f32 %v1311, %v1281
      %v1313 = vadd.f32 %v1312, %v1285
      %v1314 = vadd.f32 %v1313, %v1289
      %v1315 = vadd.f32 %v1314, %v1293
      %v1316 = vrot.slane %v1315, 4
      %v1317 = vadd.f32 %v1315, %v1316
      %v1318 = vrot.slane %v1317, 2
      %v1319 = vadd.f32 %v1317, %v1318
      %v1320 = vrot.slane %v1319, 1
      %v1321 = vadd.f32 %v1319, %v1320
      %v1322 = vadd.f32 %v1266, %v1270
      %v1323 = vadd.f32 %v1322, %v1274
      %v1324 = vadd.f32 %v1323, %v1278
      %v1325 = vadd.f32 %v1324, %v1282
      %v1326 = vadd.f32 %v1325, %v1286
      %v1327 = vadd.f32 %v1326, %v1290
      %v1328 = vadd.f32 %v1327, %v1294
      %v1329 = vrot.slane %v1328, 4
      %v1330 = vadd.f32 %v1328, %v1329
      %v1331 = vrot.slane %v1330, 2
      %v1332 = vadd.f32 %v1330, %v1331
      %v1333 = vrot.slane %v1332, 1
      %v1334 = vadd.f32 %v1332, %v1333
      %v1335 = vadd.f32 %v1267, %v1271
      %v1336 = vadd.f32 %v1335, %v1275
      %v1337 = vadd.f32 %v1336, %v1279
      %v1338 = vadd.f32 %v1337, %v1283
      %v1339 = vadd.f32 %v1338, %v1287
      %v1340 = vadd.f32 %v1339, %v1291
      %v1341 = vadd.f32 %v1340, %v1295
      %v1342 = vrot.slane %v1341, 4
      %v1343 = vadd.f32 %v1341, %v1342
      %v1344 = vrot.slane %v1343, 2
      %v1345 = vadd.f32 %v1343, %v1344
      %v1346 = vrot.slane %v1345, 1
      %v1347 = vadd.f32 %v1345, %v1346
      %v1348 = vld [vmem:[#allocation2] sm:$0x1]
      %1350 = vset.pattern.permute.xlu0 0
      %1351 = vperm.xlu0 %1350, %v1348
      %v1352 = vpop.permute.xlu0 %1351
      %v1354 = vlaneseq
      %v1355 = vshrl.u32 %v1354, 7
      %v1356 = vsub.s32 0, %v1355
      %v1357 = vrot.slane %v1352, %v1356
      %v1358 = vadd.f32 %v1308, %v1357
      %v1359 = vadd.f32 %v1321, %v1357
      %v1360 = vadd.f32 %v1334, %v1357
      %v1361 = vadd.f32 %v1347, %v1357
      %v1366 = vcombine.low %v1358, %v1359
      %v1367 = vcombine.low %v1360, %v1361
      %v1369 = vunpack.c.l.s4 1966171168
      %v1370 = vunpack.c.0.s8 %v1369
      %v1371 = vlaneseq
      %v1372 = vshrl.u32 %v1371, 7
      %v1373 = vsub.s32 %v1370, %v1372
      %v1374 = vrot.slane %v1366, %v1373
      %v1376 = vunpack.c.l.s4 1966171168
      %v1377 = vunpack.c.0.s8 %v1376
      %v1378 = vlaneseq
      %v1379 = vshrl.u32 %v1378, 7
      %v1380 = vsub.s32 %v1377, %v1379
      %v1381 = vrot.slane %v1367, %v1380
      %v1382 = vcombine.low %v1374, %v1381
      %v1384 = vunpack.c.l.s4 1966171168
      %v1385 = vunpack.c.0.s8 %v1384
      %v1386 = vlaneseq
      %v1387 = vshrl.u32 %v1386, 7
      %v1388 = vsub.s32 %v1385, %v1387
      %v1389 = vrot.slane %v1382, %v1388
      %v1391 = vlaneseq
      %vm1392 = vcmp.ge.s32.totalorder %v1391, 0
      %vm1393 = vcmp.lt.s32.totalorder %v1391, 512
      %vm1394 = vmand %vm1392, %vm1393
      %1395 = vst.msk [vmem:[%s280] sm:$0xf] %vm1394, %v1389
      %s1396 = smul.u32 4, %s20
      %p1397 = scmp.lt.s32.totalorder %s1396, 7
      %s1398 = scalar_select %p1397, %s1396, 7
      %s1399 = scalar_lea.vmem %s7, %s1398
      // Predicated region
      $region49: #{binary_classification_forward.1} parent=47 // pred_check
        %p1400 = pneg %p190
      $region50: #{binary_classification_forward.1} parent=47 // pred_check_branch
        %1402 = sbr.rel (%p1400) target = $region52
      $region51: #{binary_classification_forward.1} parent=47 // pred_region
        %s1403 = smul.u32 4, %s20
      $region52: #{binary_classification_forward.1} parent=47 // pred_fallthru
        _
    $region48: #{binary_classification_forward.1} parent=5 // pred_fallthru
      _
    %p1404 = scmp.le.s32.totalorder 2, %s15
    // Predicated region
    $region53: #{binary_classification_forward.1} parent=5 // pred_check
      %p1405 = pneg %p1404
    $region54: #{binary_classification_forward.1} parent=5 // pred_check_branch
      %1407 = sbr.rel (%p1405) target = $region56
    $region55: #{binary_classification_forward.1} parent=5 // pred_region
      %s1408 = ssub.s32 %s15, 2
      // Predicated region
      $region57: #{binary_classification_forward.1} parent=55 // pred_check
        %p1409 = pneg %p196
      $region58: #{binary_classification_forward.1} parent=55 // pred_check_branch
        %1411 = sbr.rel (%p1409) target = $region60
      $region59: #{binary_classification_forward.1} parent=55 // pred_region
        %s1412 = smul.u32 4, %s21
        %p1413 = scmp.lt.s32.totalorder %s1412, 7
        %s1414 = scalar_select %p1413, %s1412, 7
        %s1415 = scalar_lea.vmem %s7, %s1414
      $region60: #{binary_classification_forward.1} parent=55 // pred_fallthru
        _
    $region56: #{binary_classification_forward.1} parent=5 // pred_fallthru
      _
  $region6: #{binary_classification_forward.1} parent=0 // loop_footer
    %s19 = sadd.s32 1, %s15
  $region7: #{binary_classification_forward.1} parent=0 // loop_footer_branch
    %14 = sbr.rel target = $region3
  $region8: #{binary_classification_forward.1} parent=0 // loop_exit
    _

</llo_original>
